<compile_context>
chip_gen: v6e
topology: v6e:2x2x1
jax: 0.10.0
libtpu: 0.0.40
codegen_flags: <defaults>
</compile_context>

<pallas_src>
import functools
import math

import jax
import jax.numpy as jnp
from jax import lax
from jax.experimental import pallas as pl
from jax.experimental.pallas import tpu as pltpu

LANE = 128     # each of q/k/v gets one lane-aligned 128-wide segment
SUBLANE = 8    # f32 sublane tile


def _round_up(n: int, m: int) -> int:
    return ((n + m - 1) // m) * m


def pack_qkv_weights(w_query, w_key, w_value, lane: int = LANE):
    """Zero-pad each projection to `lane` columns and concat -> (D, 3*lane).

    Layout: Q in lanes [0,128), K in [128,256), V in [256,384).  Q||K exactly
    fill the first 256-lane MXU weight push (v6e/v7x); V is the trailing
    128-wide segment (exact on v5e's 128-wide MXU).  Call ONCE per parameter
    set (hoisted out of the hot path).
    """
    d = w_query.shape[0]
    assert w_key.shape[0] == d and w_value.shape[0] == d, "input dims must match"
    # Mismatched Q/K head dims would silently contract over padded lanes.
    assert w_query.shape[1] == w_key.shape[1], "Q and K head dims must match"
    assert max(w_query.shape[1], w_value.shape[1]) <= lane, \
        "head dims must fit one lane segment"

    def pad(w):
        return jnp.pad(w, ((0, 0), (0, lane - w.shape[1])))

    return jnp.concatenate([pad(w_query), pad(w_key), pad(w_value)], axis=1)


def _attention_kernel(x_ref, wqkv_ref, o_ref, *, d_k: int, lane: int, s_real: int):
    """softmax(x Wq (x Wk)^T / sqrt(d_k)) (x Wv) for one sentence block."""
    inv_sqrt_dk = 1.0 / math.sqrt(d_k)

    # bf16 MXU operands, f32 accumulation (native MXU rate on all generations).
    x = x_ref[...].astype(jnp.bfloat16)        # (S_pad, D)
    wqkv = wqkv_ref[...].astype(jnp.bfloat16)  # (D, 3*lane)

    # One fused MXU matmul for the Q, K, V projections.
    qkv = jnp.dot(x, wqkv, preferred_element_type=jnp.float32)  # (S_pad, 3*lane)
    q = qkv[:, 0 * lane:1 * lane]   # lane-aligned slices (no relayout)
    k = qkv[:, 1 * lane:2 * lane]
    v = qkv[:, 2 * lane:3 * lane]

    # Scaled scores (S_pad, S_pad): contract last axes directly, no k.T.
    # Zero-padded lanes of q/k contribute nothing, so this equals Q @ K^T.
    scores = lax.dot_general(
        q.astype(jnp.bfloat16), k.astype(jnp.bfloat16),
        dimension_numbers=(((1,), (1,)), ((), ())),
        preferred_element_type=jnp.float32,
    ) * inv_sqrt_dk

    # Mask padded key columns so the softmax ignores the zero-padded tail rows.
    s_pad = scores.shape[-1]
    if s_pad > s_real:
        col = lax.broadcasted_iota(jnp.int32, scores.shape, 1)
        scores = jnp.where(col < s_real, scores, -1e30)

    # Numerically stable softmax in f32 (v5e VPU/EUP have no bf16 path);
    # normalization deferred until after the PV matmul (O(S*lane) divides).
    m = jnp.max(scores, axis=-1, keepdims=True)
    e = jnp.exp(scores - m)
    l = jnp.sum(e, axis=-1, keepdims=True)

    ctx = jnp.dot(e.astype(jnp.bfloat16), v.astype(jnp.bfloat16),
                  preferred_element_type=jnp.float32)  # (S_pad, lane)
    inv_l = pl.reciprocal(l, approx=True)  # EUP slot -> ~free in the bundle
    o_ref[...] = ctx * inv_l               # lane-dense unmasked store


@functools.partial(jax.jit, static_argnames=("d_k", "d_v", "lane"))
def self_attention_pallas_batched(xb, w_qkv, *, d_k: int, d_v: int, lane: int = LANE):
    """Batched forward: xb (B, S, D), packed w_qkv (D, 3*lane) -> (B, S, d_v)."""
    B, S, D = xb.shape
    s_pad = _round_up(S, SUBLANE)  # (8,128)-aligned sublane dim
    if s_pad != S:
        xb = jnp.pad(xb, ((0, 0), (0, s_pad - S), (0, 0)))

    kernel = functools.partial(_attention_kernel, d_k=d_k, lane=lane, s_real=S)

    # Advisory cost on the padded/lane-dense shapes actually moved & computed.
    cost = pl.CostEstimate(
        flops=B * (2 * s_pad * D * 3 * lane           # fused QKV
                   + 2 * s_pad * s_pad * lane         # scores
                   + 2 * s_pad * s_pad * lane),       # PV
        transcendentals=B * s_pad * s_pad,
        bytes_accessed=4 * (B * s_pad * D + D * 3 * lane + B * s_pad * lane),
    )

    out = pl.pallas_call(
        kernel,
        grid=(B,),
        in_specs=[
            pl.BlockSpec((None, s_pad, D), lambda b: (b, 0, 0)),   # per-sentence block
            pl.BlockSpec((D, 3 * lane), lambda b: (0, 0)),         # weight stays resident
        ],
        out_specs=pl.BlockSpec((None, s_pad, lane), lambda b: (b, 0, 0)),
        out_shape=jax.ShapeDtypeStruct((B, s_pad, lane), jnp.float32),
        compiler_params=pltpu.CompilerParams(
            dimension_semantics=("parallel",),  # shard batch across TCs (v7x)
        ),
        cost_estimate=cost,
    )(xb, w_qkv)

    # Padded rows / lanes are dropped here; slice fuses under jit.
    return out[:, :S, :d_v]


def self_attention_pallas(x, w_query, w_key, w_value, d_k: int, lane: int = LANE):
    """Mirrors SelfAttention.forward for a single (S, D) input."""
    w_qkv = pack_qkv_weights(w_query, w_key, w_value, lane)
    out = self_attention_pallas_batched(
        x[None], w_qkv, d_k=d_k, d_v=w_value.shape[1], lane=lane)
    return out[0]


def self_attention_ref(x, w_query, w_key, w_value, d_k: int):
    q = x @ w_query
    k = x @ w_key
    v = x @ w_value
    scores = (q @ k.T) / math.sqrt(d_k)
    weights = jax.nn.softmax(scores, axis=-1)
    return weights @ v


if __name__ == "__main__":
    # Mirror the reference script: a 9-token sentence embedded into d=3 dims.
    # The nn.Embedding lookup is data prep (outside forward), done in plain JAX.
    sentence = "the quick brown fox jumps over a lazy dog"
    words = sentence.replace(",", "").split()
    s_dict = {s: i for i, s in enumerate(sorted(words))}
    token_ids = jnp.array([s_dict[w] for w in words], dtype=jnp.int32)

    d, d_q, d_k, d_v = 3, 2, 2, 4
    vocab_size = 50000

    key = jax.random.PRNGKey(0)
    k_emb, k_q, k_k, k_v, k_batch = jax.random.split(key, 5)

    emb_table = jax.random.normal(k_emb, (vocab_size, d), dtype=jnp.float32)
    x = emb_table[token_ids]  # (S=9, d=3) embedded sentence

    # torch.rand -> uniform [0, 1)
    w_query = jax.random.uniform(k_q, (d, d_q), dtype=jnp.float32)
    w_key = jax.random.uniform(k_k, (d, d_q), dtype=jnp.float32)
    w_value = jax.random.uniform(k_v, (d, d_v), dtype=jnp.float32)

    # --- single-sentence forward (exactly the module's forward semantics) ---
    out = jax.block_until_ready(
        self_attention_pallas(x, w_query, w_key, w_value, d_k))
    ref = self_attention_ref(x, w_query, w_key, w_value, d_k)
    assert out.shape == (len(words), d_v)
    # Tolerance loosened for bf16 MXU operands (per perf review); softmax
    # amplifies the ~2^-8 bf16 rounding of the score matmul inputs.
    assert jnp.allclose(out, ref, atol=1e-1, rtol=1e-1), "single-sentence mismatch"

    # --- batched path: grid over sentences, "parallel" across TensorCores ---
    xb = jax.random.normal(k_batch, (4, len(words), d), dtype=jnp.float32)
    w_qkv = pack_qkv_weights(w_query, w_key, w_value)  # packed once, reused
    outb = jax.block_until_ready(
        self_attention_pallas_batched(xb, w_qkv, d_k=d_k, d_v=d_v))
    refb = jax.vmap(
        lambda xi: self_attention_ref(xi, w_query, w_key, w_value, d_k))(xb)
    assert outb.shape == (4, len(words), d_v)
    assert jnp.allclose(outb, refb, atol=1e-1, rtol=1e-1), "batched mismatch"

    print("KERNEL_OK")
</pallas_src>

<mosaic_0001>
module attributes {stable_mosaic.version = 11 : i64} {
  func.func @_attention_kernel(%arg0: i32, %arg1: memref<1x16x3xf32, #tpu.memory_space<vmem>>, %arg2: memref<3x384xf32, #tpu.memory_space<vmem>>, %arg3: memref<1x16x128xf32, #tpu.memory_space<vmem>>) attributes {dimension_semantics = [#tpu.dimension_semantics<parallel>], iteration_bounds = array<i64: 1>, scalar_prefetch = 0 : i64, scratch_operands = 0 : i64, tpu.core_type = #tpu.core_type<tc>, window_params = [{transform_indices = @transform_0, window_bounds = array<i64: 1, 16, 3>}, {pipeline_mode = #tpu.pipeline_mode<synchronous>, transform_indices = @transform_1, window_bounds = array<i64: 3, 384>}, {transform_indices = @transform_2, window_bounds = array<i64: 1, 16, 128>}]} {
    %c0 = arith.constant 0 : index
    %c0_0 = arith.constant 0 : index
    %c0_1 = arith.constant 0 : index
    %0 = vector.load %arg1[%c0, %c0_0, %c0_1] : memref<1x16x3xf32, #tpu.memory_space<vmem>>, vector<1x16x3xf32>
    %1 = vector.shape_cast %0 : vector<1x16x3xf32> to vector<16x3xf32>
    %2 = arith.truncf %1 : vector<16x3xf32> to vector<16x3xbf16>
    %c0_2 = arith.constant 0 : index
    %c0_3 = arith.constant 0 : index
    %3 = vector.load %arg2[%c0_2, %c0_3] : memref<3x384xf32, #tpu.memory_space<vmem>>, vector<3x384xf32>
    %4 = arith.truncf %3 : vector<3x384xf32> to vector<3x384xbf16>
    %cst = arith.constant dense<0.000000e+00> : vector<16x384xf32>
    %5 = tpu.matmul %2, %4, %cst {dimension_numbers = #tpu.dot_dimension_numbers<[1], [0], [0], [1], [0, 0, 1, 1], [], []>} : vector<16x3xbf16>, vector<3x384xbf16>, vector<16x384xf32> -> vector<16x384xf32>
    %6 = vector.extract_strided_slice %5 {offsets = [0, 0], sizes = [16, 128], strides = [1, 1]} : vector<16x384xf32> to vector<16x128xf32>
    %7 = vector.extract_strided_slice %5 {offsets = [0, 128], sizes = [16, 128], strides = [1, 1]} : vector<16x384xf32> to vector<16x128xf32>
    %8 = vector.extract_strided_slice %5 {offsets = [0, 256], sizes = [16, 128], strides = [1, 1]} : vector<16x384xf32> to vector<16x128xf32>
    %9 = arith.truncf %6 : vector<16x128xf32> to vector<16x128xbf16>
    %10 = arith.truncf %7 : vector<16x128xf32> to vector<16x128xbf16>
    %cst_4 = arith.constant dense<0.000000e+00> : vector<16x16xf32>
    %11 = tpu.matmul %9, %10, %cst_4 {dimension_numbers = #tpu.dot_dimension_numbers<[1], [1], [0], [0], [0, 0, 1, 0], [], []>} : vector<16x128xbf16>, vector<16x128xbf16>, vector<16x16xf32> -> vector<16x16xf32>
    %cst_5 = arith.constant 0.707106769 : f32
    %12 = vector.broadcast %cst_5 : f32 to vector<16x16xf32>
    %13 = arith.mulf %11, %12 : vector<16x16xf32>
    %14 = tpu.iota {dimensions = array<i32: 1>} : vector<16x16xi32>
    %c9_i32 = arith.constant 9 : i32
    %15 = vector.broadcast %c9_i32 : i32 to vector<16x16xi32>
    %16 = arith.cmpi slt, %14, %15 : vector<16x16xi32>
    %cst_6 = arith.constant -1.000000e+30 : f32
    %17 = vector.broadcast %cst_6 : f32 to vector<16x16xf32>
    %18 = arith.select %16, %13, %17 : vector<16x16xi1>, vector<16x16xf32>
    %cst_7 = arith.constant dense<0xFF800000> : vector<16xf32>
    %19 = vector.multi_reduction <maximumf>, %18, %cst_7 [1] : vector<16x16xf32> to vector<16xf32>
    %20 = vector.shape_cast %19 : vector<16xf32> to vector<16x1xf32>
    %21 = vector.broadcast %20 : vector<16x1xf32> to vector<16x16xf32>
    %22 = arith.subf %18, %21 : vector<16x16xf32>
    %23 = math.exp %22 : vector<16x16xf32>
    %cst_8 = arith.constant dense<0.000000e+00> : vector<16xf32>
    %24 = vector.multi_reduction <add>, %23, %cst_8 [1] : vector<16x16xf32> to vector<16xf32>
    %25 = vector.shape_cast %24 : vector<16xf32> to vector<16x1xf32>
    %26 = arith.truncf %23 : vector<16x16xf32> to vector<16x16xbf16>
    %27 = arith.truncf %8 : vector<16x128xf32> to vector<16x128xbf16>
    %cst_9 = arith.constant dense<0.000000e+00> : vector<16x128xf32>
    %28 = tpu.matmul %26, %27, %cst_9 {dimension_numbers = #tpu.dot_dimension_numbers<[1], [0], [0], [1], [0, 0, 1, 1], [], []>} : vector<16x16xbf16>, vector<16x128xbf16>, vector<16x128xf32> -> vector<16x128xf32>
    %29 = tpu.reciprocal %25 {approx = true} : vector<16x1xf32> -> vector<16x1xf32>
    %30 = vector.broadcast %29 : vector<16x1xf32> to vector<16x128xf32>
    %31 = arith.mulf %28, %30 : vector<16x128xf32>
    %c0_10 = arith.constant 0 : index
    %c0_11 = arith.constant 0 : index
    %c0_12 = arith.constant 0 : index
    %32 = vector.load %arg3[%c0_10, %c0_11, %c0_12] : memref<1x16x128xf32, #tpu.memory_space<vmem>>, vector<1x16x128xf32>
    %33 = vector.shape_cast %32 : vector<1x16x128xf32> to vector<16x128xf32>
    %34 = vector.shape_cast %31 : vector<16x128xf32> to vector<1x16x128xf32>
    tpu.vector_store %arg3[%c0_10, %c0_11, %c0_12], %34 {strides = array<i32>} : memref<1x16x128xf32, #tpu.memory_space<vmem>>, vector<1x16x128xf32>,
    return
  }
  func.func @transform_0(%arg0: i32) -> (i32, i32, i32) {
    %c0_i32 = arith.constant 0 : i32
    %c0_i32_0 = arith.constant 0 : i32
    %c0_i32_1 = arith.constant 0 : i32
    return %arg0, %c0_i32, %c0_i32_0 : i32, i32, i32
  }
  func.func @transform_1(%arg0: i32) -> (i32, i32) {
    %c0_i32 = arith.constant 0 : i32
    %c0_i32_0 = arith.constant 0 : i32
    %c0_i32_1 = arith.constant 0 : i32
    return %c0_i32, %c0_i32_0 : i32, i32
  }
  func.func @transform_2(%arg0: i32) -> (i32, i32, i32) {
    %c0_i32 = arith.constant 0 : i32
    %c0_i32_0 = arith.constant 0 : i32
    %c0_i32_1 = arith.constant 0 : i32
    return %arg0, %c0_i32, %c0_i32_0 : i32, i32, i32
  }
}

</mosaic_0001>

<llo_original>
// kernel: self_attention_pallas_batched.1
$region0: #{self_attention_pallas_batched.1}
  #allocation0 [shape = 'u32[]', space=smem, size = 0x4, offset = 0x4, fixed_abs, tag = 'smem constant byte address 0x4 - core index']
  #allocation1 [shape = 'u32[144,128]{1,0:T(1,128)}', space=vmem, size = 0x12000, scoped, tag = 'internal scratch']
  %s0 = inlined_call_operand.vmem [shape: f32[1,16,3], index: 0, kind: input, shape index: {}]
  %s1 = inlined_call_operand.vmem [shape: f32[3,384], index: 1, kind: input, shape index: {}]
  %s2 = inlined_call_operand.vmem [shape: f32[1,16,128], index: 2, kind: output, shape index: {}]
  %s3 = sld [smem:[#allocation0]]
  $region18: #{self_attention_pallas_batched.1} parent=0
    _
  %s5 = ssub.s32 1, %s3
  %s6 = scalar_select 0, %s5, %s3
  // Predicated region
  $region2: #{self_attention_pallas_batched.1} parent=0 // pred_check
    _
  $region3: #{self_attention_pallas_batched.1} parent=0 // pred_check_branch
    %8 = sbr.rel (0) target = $region5
  $region4: #{self_attention_pallas_batched.1} parent=0 // pred_region
    _
  $region5: #{self_attention_pallas_batched.1} parent=0 // pred_fallthru
    _
  // Predicated region
  $region6: #{self_attention_pallas_batched.1} parent=0 // pred_check
    _
  $region7: #{self_attention_pallas_batched.1} parent=0 // pred_check_branch
    %10 = sbr.rel (0) target = $region9
  $region8: #{self_attention_pallas_batched.1} parent=0 // pred_region
    _
  $region9: #{self_attention_pallas_batched.1} parent=0 // pred_fallthru
    _
  %v12 = vld [vmem:[%s0] sm:$0xff]
  %v13 = vld [vmem:[%s0 + $0x8] sm:$0xff]
  %v14 = vpack.c.bf16 %v13, %v12
  %v15 = vld [vmem:[%s1] sm:$0x77]
  %v16 = vld [vmem:[%s1 + $0x8] sm:$0x7]
  %v18 = vcombine.high %v15, %v15
  %v20 = vpack.c.bf16 %v15, %v15
  %v21 = vpack.c.bf16 %v18, %v18
  %v22 = vpack.c.bf16 %v16, %v16
  %vm23 = vcmask 23552
  %v25 = vsel %vm23, %v14, 0
  %vm27 = vcmask 1040384
  %vm28 = vcmask 1041408
  %v29 = vsel %vm27, 4294967295, 65535
  %v30 = vsel %vm28, %v29, 0
  %v32 = vand.u32 %v20, %v30
  %v35 = vand.u32 %v21, %v30
  %v38 = vand.u32 %v22, %v30
  %40 = vmatprep.subr.bf16.mxu0 0
  %41 = vmatpush1.bf16.msra.mxu0 0
  %42 = vmatprep.subr.bf16.mxu0 0
  %43 = vmatpush1.bf16.msra.mxu0 0
  %44 = vmatprep.subr.bf16.mxu0 0
  %45 = vmatpush1.bf16.msra.mxu0 0
  %46 = vmatprep.subr.bf16.mxu0 0
  %47 = vmatpush1.bf16.msra.mxu0 0
  %48 = vmatprep.subr.bf16.mxu0 0
  %49 = vmatpush1.bf16.msra.mxu0 0
  %50 = vmatprep.subr.bf16.mxu0 0
  %51 = vmatpush1.bf16.msra.mxu0 0
  %52 = vmatprep.subr.bf16.mxu0 0
  %53 = vmatpush1.bf16.msra.mxu0 0
  %54 = vmatprep.subr.bf16.mxu0 %v35
  %55 = vmatpush1.bf16.msra.mxu0 %v32
  %56 = vmatprep.subr.bf16.mxu0 0
  %57 = vmatpush2.bf16.msra.mxu0 0
  %58 = vmatprep.subr.bf16.mxu0 0
  %59 = vmatpush2.bf16.msra.mxu0 0
  %60 = vmatprep.subr.bf16.mxu0 0
  %61 = vmatpush2.bf16.msra.mxu0 0
  %62 = vmatprep.subr.bf16.mxu0 0
  %63 = vmatpush2.bf16.msra.mxu0 0
  %64 = vmatprep.subr.bf16.mxu0 0
  %65 = vmatpush2.bf16.msra.mxu0 0
  %66 = vmatprep.subr.bf16.mxu0 0
  %67 = vmatpush2.bf16.msra.mxu0 0
  %68 = vmatprep.subr.bf16.mxu0 0
  %69 = vmatpush2.bf16.msra.mxu0 0
  %70 = vmatprep.subr.bf16.mxu0 0
  %71 = vmatpush2.bf16.msra.mxu0 0
  %72 = vmatprep.mubr.bf16.mxu0 0
  %73 = vmatmul.mubr.bf16.gmra.mxu0 %v25
  %v74 = vpop.f32.mrf.mxu0
  %v75 = vadd.f32 0.0, %v74
  %v76 = vpop.f32.mrf.mxu0
  %v77 = vadd.f32 0.0, %v76
  %v78 = vpop.f32.mrf.mxu0
  %v79 = vadd.f32 0.0, %v78
  %v80 = vpop.f32.mrf.mxu0
  %v81 = vadd.f32 0.0, %v80
  %82 = vdwg.mxu0
  %83 = vmatprep.subr.bf16.mxu0 0
  %84 = vmatpush1.bf16.msra.mxu0 0
  %85 = vmatprep.subr.bf16.mxu0 0
  %86 = vmatpush1.bf16.msra.mxu0 0
  %87 = vmatprep.subr.bf16.mxu0 0
  %88 = vmatpush1.bf16.msra.mxu0 0
  %89 = vmatprep.subr.bf16.mxu0 0
  %90 = vmatpush1.bf16.msra.mxu0 0
  %91 = vmatprep.subr.bf16.mxu0 0
  %92 = vmatpush1.bf16.msra.mxu0 0
  %93 = vmatprep.subr.bf16.mxu0 0
  %94 = vmatpush1.bf16.msra.mxu0 0
  %95 = vmatprep.subr.bf16.mxu0 0
  %96 = vmatpush1.bf16.msra.mxu0 0
  %97 = vmatprep.subr.bf16.mxu0 0
  %98 = vmatpush1.bf16.msra.mxu0 %v38
  %99 = vmatprep.subr.bf16.mxu0 0
  %100 = vmatpush2.bf16.msra.mxu0 0
  %101 = vmatprep.subr.bf16.mxu0 0
  %102 = vmatpush2.bf16.msra.mxu0 0
  %103 = vmatprep.subr.bf16.mxu0 0
  %104 = vmatpush2.bf16.msra.mxu0 0
  %105 = vmatprep.subr.bf16.mxu0 0
  %106 = vmatpush2.bf16.msra.mxu0 0
  %107 = vmatprep.subr.bf16.mxu0 0
  %108 = vmatpush2.bf16.msra.mxu0 0
  %109 = vmatprep.subr.bf16.mxu0 0
  %110 = vmatpush2.bf16.msra.mxu0 0
  %111 = vmatprep.subr.bf16.mxu0 0
  %112 = vmatpush2.bf16.msra.mxu0 0
  %113 = vmatprep.subr.bf16.mxu0 0
  %114 = vmatpush2.bf16.msra.mxu0 0
  %115 = vmatprep.mubr.bf16.mxu0 0
  %116 = vmatmul.mubr.bf16.gmra.mxu0 %v25
  %v117 = vpop.f32.mrf.mxu0
  %v118 = vadd.f32 0.0, %v117
  %v119 = vpop.f32.mrf.mxu0
  %v120 = vpop.f32.mrf.mxu0
  %v121 = vadd.f32 0.0, %v120
  %v122 = vpop.f32.mrf.mxu0
  %123 = vdwg.mxu0
  %v124 = vpack.c.bf16 %v79, %v75
  %v125 = vpack.c.bf16 %v81, %v77
  %126 = vmatprep.subr.bf16.mxu0 0
  %127 = vmatpush1.bf16.xpose.msra.mxu0 0
  %128 = vmatprep.subr.bf16.mxu0 0
  %129 = vmatpush1.bf16.xpose.msra.mxu0 0
  %130 = vmatprep.subr.bf16.mxu0 0
  %131 = vmatpush1.bf16.xpose.msra.mxu0 0
  %132 = vmatprep.subr.bf16.mxu0 0
  %133 = vmatpush1.bf16.xpose.msra.mxu0 0
  %134 = vmatprep.subr.bf16.mxu0 0
  %135 = vmatpush1.bf16.xpose.msra.mxu0 0
  %136 = vmatprep.subr.bf16.mxu0 0
  %137 = vmatpush1.bf16.xpose.msra.mxu0 0
  %138 = vmatprep.subr.bf16.mxu0 0
  %139 = vmatpush1.bf16.xpose.msra.mxu0 0
  %140 = vmatprep.subr.bf16.mxu0 0
  %141 = vmatpush1.bf16.xpose.msra.mxu0 %v125
  %142 = vmatprep.subr.bf16.mxu0 0
  %143 = vmatpush2.bf16.xpose.msra.mxu0 0
  %144 = vmatprep.subr.bf16.mxu0 0
  %145 = vmatpush2.bf16.xpose.msra.mxu0 0
  %146 = vmatprep.subr.bf16.mxu0 0
  %147 = vmatpush2.bf16.xpose.msra.mxu0 0
  %148 = vmatprep.subr.bf16.mxu0 0
  %149 = vmatpush2.bf16.xpose.msra.mxu0 0
  %150 = vmatprep.subr.bf16.mxu0 0
  %151 = vmatpush2.bf16.xpose.msra.mxu0 0
  %152 = vmatprep.subr.bf16.mxu0 0
  %153 = vmatpush2.bf16.xpose.msra.mxu0 0
  %154 = vmatprep.subr.bf16.mxu0 0
  %155 = vmatpush2.bf16.xpose.msra.mxu0 0
  %156 = vmatprep.subr.bf16.mxu0 0
  %157 = vmatpush2.bf16.xpose.msra.mxu0 0
  %158 = vmatprep.mubr.bf16.mxu0 0
  %159 = vmatmul.mubr.bf16.gmra.mxu0 %v124
  %v160 = vpop.f32.mrf.mxu0
  %v161 = vadd.f32 0.0, %v160
  %v162 = vpop.f32.mrf.mxu0
  %v163 = vpop.f32.mrf.mxu0
  %v164 = vadd.f32 0.0, %v163
  %v165 = vpop.f32.mrf.mxu0
  %166 = vdwg.mxu0
  %v167 = vmul.f32 %v161, 0.70710677
  %v168 = vmul.f32 %v164, 0.70710677
  %v169 = vlaneseq
  %v170 = vand.u32 %v169, 127
  %vm171 = vcmp.lt.s32.totalorder %v170, 9
  %v172 = vsel %vm171, %v167, -1e+30
  %v173 = vsel %vm171, %v168, -1e+30
  %vm174 = vcmask 130048
  %v175 = vsel %vm174, %v172, -inf
  %176 = vmax.xlane.f32.xlu0 %v175
  %v177 = vpop.xlane.xlu0 %176
  %v178 = vsel %vm174, %v173, -inf
  %179 = vmax.xlane.f32.xlu0 %v178
  %v180 = vpop.xlane.xlu0 %179
  %v181 = vsub.f32 %v172, %v177
  %v182 = vsub.f32 %v173, %v180
  %v183 = vmul.f32 %v181, 1.442695
  %v184 = vpow.pop %v183
  %v185 = vmul.f32 %v182, 1.442695
  %v186 = vpow.pop %v185
  %v187 = vsel %vm174, %v184, 0.0
  %188 = vadd.xlane.f32.xlu0 %v187
  %v189 = vpop.xlane.xlu0 %188
  %v190 = vsel %vm174, %v186, 0.0
  %191 = vadd.xlane.f32.xlu0 %v190
  %v192 = vpop.xlane.xlu0 %191
  %v193 = vpack.c.bf16 %v186, %v184
  %v194 = vpack.c.bf16 %v121, %v118
  %v196 = vsel %vm174, %v193, 0
  %198 = vmatprep.subr.bf16.mxu0 0
  %199 = vmatpush1.bf16.msra.mxu0 0
  %200 = vmatprep.subr.bf16.mxu0 0
  %201 = vmatpush1.bf16.msra.mxu0 0
  %202 = vmatprep.subr.bf16.mxu0 0
  %203 = vmatpush1.bf16.msra.mxu0 0
  %204 = vmatprep.subr.bf16.mxu0 0
  %205 = vmatpush1.bf16.msra.mxu0 0
  %206 = vmatprep.subr.bf16.mxu0 0
  %207 = vmatpush1.bf16.msra.mxu0 0
  %208 = vmatprep.subr.bf16.mxu0 0
  %209 = vmatpush1.bf16.msra.mxu0 0
  %210 = vmatprep.subr.bf16.mxu0 0
  %211 = vmatpush1.bf16.msra.mxu0 0
  %212 = vmatprep.subr.bf16.mxu0 0
  %213 = vmatpush1.bf16.msra.mxu0 %v194
  %214 = vmatprep.subr.bf16.mxu0 0
  %215 = vmatpush2.bf16.msra.mxu0 0
  %216 = vmatprep.subr.bf16.mxu0 0
  %217 = vmatpush2.bf16.msra.mxu0 0
  %218 = vmatprep.subr.bf16.mxu0 0
  %219 = vmatpush2.bf16.msra.mxu0 0
  %220 = vmatprep.subr.bf16.mxu0 0
  %221 = vmatpush2.bf16.msra.mxu0 0
  %222 = vmatprep.subr.bf16.mxu0 0
  %223 = vmatpush2.bf16.msra.mxu0 0
  %224 = vmatprep.subr.bf16.mxu0 0
  %225 = vmatpush2.bf16.msra.mxu0 0
  %226 = vmatprep.subr.bf16.mxu0 0
  %227 = vmatpush2.bf16.msra.mxu0 0
  %228 = vmatprep.subr.bf16.mxu0 0
  %229 = vmatpush2.bf16.msra.mxu0 0
  %230 = vmatprep.mubr.bf16.mxu0 0
  %231 = vmatmul.mubr.bf16.gmra.mxu0 %v196
  %v232 = vpop.f32.mrf.mxu0
  %v233 = vadd.f32 0.0, %v232
  %v234 = vpop.f32.mrf.mxu0
  %v235 = vpop.f32.mrf.mxu0
  %v236 = vadd.f32 0.0, %v235
  %v237 = vpop.f32.mrf.mxu0
  %238 = vdwg.mxu0
  %v239 = vrcp.pop %v189
  %v240 = vrcp.pop %v192
  %v241 = vmul.f32 %v233, %v239
  %v242 = vmul.f32 %v236, %v240
  %243 = vst [vmem:[%s2] sm:$0xff] %v241
  %244 = vst [vmem:[%s2 + $0x8] sm:$0xff] %v242
  // Predicated region
  $region10: #{self_attention_pallas_batched.1} parent=0 // pred_check
    _
  $region11: #{self_attention_pallas_batched.1} parent=0 // pred_check_branch
    %246 = sbr.rel (0) target = $region13
  $region12: #{self_attention_pallas_batched.1} parent=0 // pred_region
    _
  $region13: #{self_attention_pallas_batched.1} parent=0 // pred_fallthru
    _
  // Predicated region
  $region14: #{self_attention_pallas_batched.1} parent=0 // pred_check
    _
  $region15: #{self_attention_pallas_batched.1} parent=0 // pred_check_branch
    %248 = sbr.rel (0) target = $region17
  $region16: #{self_attention_pallas_batched.1} parent=0 // pred_region
    _
  $region17: #{self_attention_pallas_batched.1} parent=0 // pred_fallthru
    _

</llo_original>
